<compile_context>
chip_gen: v6e
topology: v6e:2x2x1
jax: 0.10.0
libtpu: 0.0.40
codegen_flags: <defaults>
</compile_context>

<pallas_src>
import numpy as np

import jax
import jax.numpy as jnp
from jax.experimental import pallas as pl
from jax.experimental.pallas import tpu as pltpu


def _round_up(x, m):
    return (x + m - 1) // m * m


def _patch_proj_kernel(x_ref, w_ref, b_ref, o_ref):
    # x_ref: (TM, K) streamed patch tile; w_ref: (K, E_pad) VMEM-resident;
    # b_ref: (1, E_pad) VMEM-resident.  Accumulate in f32 on the MXU.
    acc = jnp.dot(x_ref[...], w_ref[...], preferred_element_type=jnp.float32)
    o_ref[...] = (acc + b_ref[...]).astype(o_ref.dtype)


def _choose_tm(M, K, E_pad, in_itemsize, out_itemsize,
               vmem_budget_bytes=12 * 1024 * 1024, tm_cap=8192):
    """Pick the M-tile size.

    * As large as possible (amortize ~0.35 us/grid-step overhead) subject to a
      double-buffered VMEM budget that fits under the default scoped-VMEM
      limit on every generation (v5e 16 MiB, v6e 32 MiB, v7x 32 of 64 MiB).
      The K input tile lane-pads to a multiple of 128 in VMEM, so count that.
    * Megacore-aware (v7x): keep at least 2 grid steps when M allows so both
      TensorCores get work; neutral on single-TC v5e/v6e.
    """
    K_pad = _round_up(K, 128)
    per_row_bytes = 2 * (K_pad * in_itemsize + E_pad * out_itemsize)  # x2 double-buffer
    tm = min(tm_cap, max(8, (vmem_budget_bytes // per_row_bytes) // 8 * 8))
    if M >= 16:
        tm = min(tm, _round_up(pl.cdiv(M, 2), 8))   # >= 2 grid steps
    elif M < 8:
        tm = M                                       # tiny M: full-dim block
    else:
        tm = min(tm, _round_up(M, 8))
    return int(tm)


def _patch_proj(patches, weight_t, bias, *, out_dtype=None):
    """patches: (M, K), weight_t: (K, E), bias: (E,)  ->  (M, E) out_dtype."""
    M, K = patches.shape
    E = weight_t.shape[1]
    if out_dtype is None:
        out_dtype = patches.dtype

    # Lane-dense output: pad E up to a multiple of 128 (unmasked stores).
    E_pad = _round_up(E, 128)
    if E_pad != E:
        weight_t = jnp.pad(weight_t, ((0, 0), (0, E_pad - E)))
        bias = jnp.pad(bias, (0, E_pad - E))
    weight_t = weight_t.astype(patches.dtype)
    bias2d = bias.astype(jnp.float32).reshape(1, E_pad)

    tm = _choose_tm(M, K, E_pad,
                    np.dtype(patches.dtype).itemsize,
                    np.dtype(out_dtype).itemsize)

    out = pl.pallas_call(
        _patch_proj_kernel,
        out_shape=jax.ShapeDtypeStruct((M, E_pad), out_dtype),
        grid_spec=pltpu.PrefetchScalarGridSpec(
            num_scalar_prefetch=0,
            grid=(pl.cdiv(M, tm),),                       # ragged last block OK
            in_specs=[
                pl.BlockSpec((tm, K), lambda i: (i, 0)),      # streamed patches
                pl.BlockSpec((K, E_pad), lambda i: (0, 0)),   # VMEM-resident weight
                pl.BlockSpec((1, E_pad), lambda i: (0, 0)),   # VMEM-resident bias
            ],
            out_specs=pl.BlockSpec((tm, E_pad), lambda i: (i, 0)),
        ),
        compiler_params=pltpu.CompilerParams(
            # Independent M-tiles: megacore-parallel on v7x, neutral on v5e/v6e.
            dimension_semantics=("parallel",),
            # Let XLA fuse the im2col reshape/transpose producer into the
            # patches operand instead of materializing it in HBM.
            allow_input_fusion=[True, False, False],
        ),
    )(patches, weight_t, bias2d)

    if E_pad != E:
        out = out[:, :E]     # fuses with the downstream reshape/transpose
    return out


class PatchEmbed:
    """Image to Patch Embedding (JAX/Pallas).  Mirrors the PyTorch module.

    Default call returns (B, embed_dim, Hp, Wp) like the nn.Module; pass
    channels_last=True to get (B, Hp, Wp, embed_dim) and skip the final NCHW
    transpose HBM round trip (the natural layout for Swin's flatten+LayerNorm).
    """

    def __init__(self, patch_size=4, in_chans=3, embed_dim=96, key=None,
                 compute_dtype=None):
        self.patch_size = (patch_size, patch_size)
        self.in_chans = in_chans
        self.embed_dim = embed_dim
        self.compute_dtype = compute_dtype   # e.g. jnp.bfloat16 for the fast path
        if key is None:
            key = jax.random.PRNGKey(0)
        kw, kb = jax.random.split(key)
        # nn.Conv2d weight: (embed_dim, in_chans, P, P); bias: (embed_dim,)
        fan_in = in_chans * patch_size * patch_size
        bound = 1.0 / (fan_in ** 0.5)
        self.weight = jax.random.uniform(
            kw, (embed_dim, in_chans, patch_size, patch_size),
            minval=-bound, maxval=bound, dtype=jnp.float32)
        self.bias = jax.random.uniform(
            kb, (embed_dim,), minval=-bound, maxval=bound, dtype=jnp.float32)
        # norm_layer=None in the reference default -> no norm.

    def __call__(self, x, channels_last=False):
        """x: (B, C, H, W) -> (B, embed_dim, Hp, Wp)
        (or (B, Hp, Wp, embed_dim) when channels_last=True)."""
        B, C, H, W = x.shape
        ph, pw = self.patch_size
        # F.pad(x, (0, pad_w)) pads W on the right; (0,0,0,pad_h) pads H below.
        pad_w = (pw - W % pw) % pw
        pad_h = (ph - H % ph) % ph
        if pad_w or pad_h:
            x = jnp.pad(x, ((0, 0), (0, 0), (0, pad_h), (0, pad_w)))
        Hp = (H + pad_h) // ph
        Wp = (W + pad_w) // pw

        compute_dtype = self.compute_dtype or x.dtype

        # Patchify: (B, C, Hp, ph, Wp, pw) -> (B, Hp, Wp, C, ph, pw) -> (M, K)
        # with K ordered (c, ph, pw) to match Conv2d weight flattening.
        # TODO(synk): a fully in-kernel patchify (streaming NCHW blocks and
        # doing the (c,ph,pw)->K shuffle on-chip) needs a lane<->sublane
        # relayout on pw=4 minor dims that Mosaic does not lower cleanly; we
        # keep the im2col as an XLA producer and mark the operand with
        # allow_input_fusion so it can be fused into the pallas_call instead
        # of being materialized in HBM.
        xp = x.reshape(B, C, Hp, ph, Wp, pw)
        xp = jnp.transpose(xp, (0, 2, 4, 1, 3, 5))
        patches = xp.reshape(B * Hp * Wp, C * ph * pw).astype(compute_dtype)

        # Conv weight flattened to (K, E).
        w_t = self.weight.reshape(self.embed_dim, C * ph * pw).T

        out = _patch_proj(patches, w_t, self.bias, out_dtype=compute_dtype)  # (M, E)

        out = out.reshape(B, Hp, Wp, self.embed_dim)
        if channels_last:
            # Fast path: skips one full HBM round trip of the largest array.
            return out
        return jnp.transpose(out, (0, 3, 1, 2))               # (B, E, Hp, Wp)


def _reference(module, x):
    """Plain-JAX reference of the PyTorch forward (pad -> strided conv)."""
    B, C, H, W = x.shape
    ph, pw = module.patch_size
    pad_w = (pw - W % pw) % pw
    pad_h = (ph - H % ph) % ph
    if pad_w or pad_h:
        x = jnp.pad(x, ((0, 0), (0, 0), (0, pad_h), (0, pad_w)))
    Hp, Wp = (H + pad_h) // ph, (W + pad_w) // pw
    xp = x.reshape(B, C, Hp, ph, Wp, pw)
    xp = jnp.transpose(xp, (0, 2, 4, 1, 3, 5)).reshape(B * Hp * Wp, C * ph * pw)
    ref = xp @ module.weight.reshape(module.embed_dim, -1).T + module.bias
    return jnp.transpose(ref.reshape(B, Hp, Wp, module.embed_dim), (0, 3, 1, 2))


if __name__ == "__main__":
    key = jax.random.PRNGKey(0)
    k_param, k_x, k_x2 = jax.random.split(key, 3)

    # --- Test 1: evenly dividing shapes (matches the module defaults scale) ---
    B, C, H, W = 2, 4, 16, 16
    patch_size, embed_dim = 4, 32
    module = PatchEmbed(patch_size=patch_size, in_chans=C,
                        embed_dim=embed_dim, key=k_param)
    x = jax.random.normal(k_x, (B, C, H, W), dtype=jnp.float32)

    out = jax.block_until_ready(jax.jit(module.__call__)(x))
    ref = _reference(module, x)
    assert out.shape == (B, embed_dim, H // patch_size, W // patch_size)
    assert jnp.allclose(out, ref, atol=1e-4, rtol=1e-4)

    # --- Test 2: ragged spatial dims (exercises the F.pad path), M not a
    #             multiple of the tile (exercises the ragged last grid block),
    #             and E < 128 (exercises the lane-pad + slice path). ---
    B2, C2, H2, W2, E2 = 1, 3, 18, 18, 96
    module2 = PatchEmbed(patch_size=4, in_chans=C2, embed_dim=E2, key=k_param)
    x2 = jax.random.normal(k_x2, (B2, C2, H2, W2), dtype=jnp.float32)

    out2 = jax.block_until_ready(jax.jit(module2.__call__)(x2))
    ref2 = _reference(module2, x2)
    assert out2.shape == (B2, E2, 5, 5)
    assert jnp.allclose(out2, ref2, atol=1e-4, rtol=1e-4)

    print("KERNEL_OK")
</pallas_src>

<mosaic_0001>
module attributes {stable_mosaic.version = 11 : i64} {
  func.func @_patch_proj_kernel(%arg0: i32, %arg1: memref<16x64xf32, #tpu.memory_space<vmem>>, %arg2: memref<64x128xf32, #tpu.memory_space<vmem>>, %arg3: memref<1x128xf32, #tpu.memory_space<vmem>>, %arg4: memref<16x128xf32, #tpu.memory_space<vmem>>) attributes {dimension_semantics = [#tpu.dimension_semantics<parallel>], iteration_bounds = array<i64: 2>, scalar_prefetch = 0 : i64, scratch_operands = 0 : i64, tpu.core_type = #tpu.core_type<tc>, window_params = [{transform_indices = @transform_0, window_bounds = array<i64: 16, 64>}, {pipeline_mode = #tpu.pipeline_mode<synchronous>, transform_indices = @transform_1, window_bounds = array<i64: 64, 128>}, {pipeline_mode = #tpu.pipeline_mode<synchronous>, transform_indices = @transform_2, window_bounds = array<i64: 1, 128>}, {transform_indices = @transform_3, window_bounds = array<i64: 16, 128>}]} {
    %c0 = arith.constant 0 : index
    %c0_0 = arith.constant 0 : index
    %0 = vector.load %arg1[%c0, %c0_0] : memref<16x64xf32, #tpu.memory_space<vmem>>, vector<16x64xf32>
    %c0_1 = arith.constant 0 : index
    %c0_2 = arith.constant 0 : index
    %1 = vector.load %arg2[%c0_1, %c0_2] : memref<64x128xf32, #tpu.memory_space<vmem>>, vector<64x128xf32>
    %cst = arith.constant dense<0.000000e+00> : vector<16x128xf32>
    %2 = tpu.matmul %0, %1, %cst {dimension_numbers = #tpu.dot_dimension_numbers<[1], [0], [0], [1], [0, 0, 1, 1], [], []>} : vector<16x64xf32>, vector<64x128xf32>, vector<16x128xf32> -> vector<16x128xf32>
    %c0_3 = arith.constant 0 : index
    %c0_4 = arith.constant 0 : index
    %3 = vector.load %arg3[%c0_3, %c0_4] : memref<1x128xf32, #tpu.memory_space<vmem>>, vector<1x128xf32>
    %4 = vector.broadcast %3 : vector<1x128xf32> to vector<16x128xf32>
    %5 = arith.addf %2, %4 : vector<16x128xf32>
    %c0_5 = arith.constant 0 : index
    %c0_6 = arith.constant 0 : index
    %6 = vector.load %arg4[%c0_5, %c0_6] : memref<16x128xf32, #tpu.memory_space<vmem>>, vector<16x128xf32>
    tpu.vector_store %arg4[%c0_5, %c0_6], %5 {strides = array<i32>} : memref<16x128xf32, #tpu.memory_space<vmem>>, vector<16x128xf32>,
    return
  }
  func.func @transform_0(%arg0: i32) -> (i32, i32) {
    %c0_i32 = arith.constant 0 : i32
    %c0_i32_0 = arith.constant 0 : i32
    return %arg0, %c0_i32 : i32, i32
  }
  func.func @transform_1(%arg0: i32) -> (i32, i32) {
    %c0_i32 = arith.constant 0 : i32
    %c0_i32_0 = arith.constant 0 : i32
    %c0_i32_1 = arith.constant 0 : i32
    return %c0_i32, %c0_i32_0 : i32, i32
  }
  func.func @transform_2(%arg0: i32) -> (i32, i32) {
    %c0_i32 = arith.constant 0 : i32
    %c0_i32_0 = arith.constant 0 : i32
    %c0_i32_1 = arith.constant 0 : i32
    return %c0_i32, %c0_i32_0 : i32, i32
  }
  func.func @transform_3(%arg0: i32) -> (i32, i32) {
    %c0_i32 = arith.constant 0 : i32
    %c0_i32_0 = arith.constant 0 : i32
    return %arg0, %c0_i32 : i32, i32
  }
}

</mosaic_0001>

<llo_original>
// kernel: a_call__.1
$region0: #{a_call__.1}
  #allocation0 [shape = 'u32[]', space=smem, size = 0x4, offset = 0x4, fixed_abs, tag = 'smem constant byte address 0x4 - core index']
  #allocation1 [shape = 'u32[144,128]{1,0:T(1,128)}', space=vmem, size = 0x12000, scoped, tag = 'internal scratch']
  %s0 = inlined_call_operand.vmem [shape: f32[32,64], index: 0, kind: input, shape index: {}]
  %s1 = inlined_call_operand.vmem [shape: f32[64,128], index: 1, kind: input, shape index: {}]
  %s2 = inlined_call_operand.vmem [shape: f32[1,128], index: 2, kind: input, shape index: {}]
  %s3 = inlined_call_operand.hbm [shape: f32[32,128], index: 3, kind: output, shape index: {}]
  %s4 = sld [smem:[#allocation0]]
  $region45: #{a_call__.1} parent=0
    _
  %s6 = ssub.s32 1, %s4
  %s7 = scalar_select 0, %s6, %s4
  $region1: #{a_call__.1} parent=0
    #allocation2 [shape = 'u8[16384]{0}', space=vmem, size = 0x4000, scoped, tag = 'output window, operand 0']
    #allocation3 [shape = 's32[2]{0}', space=sflag, size = 0x8, scoped, tag = 'scoped memory for a_call__.1']
    %8 = vsyncpa [#allocation3], 0
    %s9 = scalar_lea.sflag [#allocation3], 1
    %10 = vsyncpa %s9, 0
    loop: start=0, step=1, limit=4
    $region2: #{a_call__.1} parent=1 // loop_pre_header
      _
    $region3: #{a_call__.1} parent=1 // loop_header
      %s12 = sphi 0, %s16
      %p13 = scmp.ge.s32.totalorder %s12, 4
      %s22 = sphi 0, %s24
      %s25 = sphi 0, %s22
      %s26 = sphi 0, %s25
      %s42 = sphi 0, %s26
      %s46 = sphi 0, %s46
      %s48 = sphi 0, %s46
      %s49 = sphi 0, %s48
      %s63 = sphi 0, %s49
      %s67 = sphi 0, %s67
      %s69 = sphi 0, %s67
      %s70 = sphi 0, %s69
      %s84 = sphi 0, %s70
      %s90 = sphi 0, %s92
      %s93 = sphi 0, %s90
      %s94 = sphi 0, %s93
      %s110 = sphi 0, %s94
    $region4: #{a_call__.1} parent=1 // loop_header_branch
      %15 = sbr.rel (%p13) target = $region8
    $region5: #{a_call__.1} parent=1 // loop_body
      %s17 = ssub.s32 %s12, 1
      %s18 = ssub.s32 %s12, 2
      %s19 = sadd.s32 %s12, 1
      %s20 = ssub.s32 %s12, %s19
      %p21 = scmp.eq.s32.totalorder %s20, 0
      %s23 = sadd.s32 %s22, 1
      %s24 = scalar_select %p21, %s22, %s23
      %p27 = pneg %p21
      %p28 = scmp.eq.s32.totalorder %s12, 1
      %p29 = por %p27, %p28
      %p30 = scmp.ne.s32.totalorder %s22, %s25
      %p31 = scmp.eq.s32.totalorder %s12, 0
      %p32 = por %p30, %p31
      %p33 = scmp.ne.s32.totalorder %s22, %s25
      %p34 = scmp.eq.s32.totalorder %s17, 1
      %p35 = por %p33, %p34
      %p36 = scmp.ne.s32.totalorder %s25, %s26
      %p37 = scmp.eq.s32.totalorder %s17, 0
      %p38 = por %p36, %p37
      %p39 = scmp.ne.s32.totalorder %s25, %s26
      %p40 = scmp.eq.s32.totalorder %s18, 1
      %p41 = por %p39, %p40
      %p43 = scmp.ne.s32.totalorder %s26, %s42
      %p44 = scmp.eq.s32.totalorder %s18, 0
      %p45 = por %p43, %p44
      %s47 = sadd.s32 %s46, 1
      %p50 = scmp.eq.s32.totalorder %s12, 1
      %p51 = scmp.ne.s32.totalorder %s46, %s48
      %p52 = scmp.eq.s32.totalorder %s12, 0
      %p53 = por %p51, %p52
      %p54 = scmp.ne.s32.totalorder %s46, %s48
      %p55 = scmp.eq.s32.totalorder %s17, 1
      %p56 = por %p54, %p55
      %p57 = scmp.ne.s32.totalorder %s48, %s49
      %p58 = scmp.eq.s32.totalorder %s17, 0
      %p59 = por %p57, %p58
      %p60 = scmp.ne.s32.totalorder %s48, %s49
      %p61 = scmp.eq.s32.totalorder %s18, 1
      %p62 = por %p60, %p61
      %p64 = scmp.ne.s32.totalorder %s49, %s63
      %p65 = scmp.eq.s32.totalorder %s18, 0
      %p66 = por %p64, %p65
      %s68 = sadd.s32 %s67, 1
      %p71 = scmp.eq.s32.totalorder %s12, 1
      %p72 = scmp.ne.s32.totalorder %s67, %s69
      %p73 = scmp.eq.s32.totalorder %s12, 0
      %p74 = por %p72, %p73
      %p75 = scmp.ne.s32.totalorder %s67, %s69
      %p76 = scmp.eq.s32.totalorder %s17, 1
      %p77 = por %p75, %p76
      %p78 = scmp.ne.s32.totalorder %s69, %s70
      %p79 = scmp.eq.s32.totalorder %s17, 0
      %p80 = por %p78, %p79
      %p81 = scmp.ne.s32.totalorder %s69, %s70
      %p82 = scmp.eq.s32.totalorder %s18, 1
      %p83 = por %p81, %p82
      %p85 = scmp.ne.s32.totalorder %s70, %s84
      %p86 = scmp.eq.s32.totalorder %s18, 0
      %p87 = por %p85, %p86
      %s88 = ssub.s32 %s12, %s19
      %p89 = scmp.eq.s32.totalorder %s88, 0
      %s91 = sadd.s32 %s90, 1
      %s92 = scalar_select %p89, %s90, %s91
      %p95 = pneg %p89
      %p96 = scmp.eq.s32.totalorder %s12, 1
      %p97 = por %p95, %p96
      %p98 = scmp.ne.s32.totalorder %s90, %s93
      %p99 = scmp.eq.s32.totalorder %s12, 0
      %p100 = por %p98, %p99
      %p101 = scmp.ne.s32.totalorder %s90, %s93
      %p102 = scmp.eq.s32.totalorder %s17, 1
      %p103 = por %p101, %p102
      %p104 = scmp.ne.s32.totalorder %s93, %s94
      %p105 = scmp.eq.s32.totalorder %s17, 0
      %p106 = por %p104, %p105
      %p107 = scmp.ne.s32.totalorder %s93, %s94
      %p108 = scmp.eq.s32.totalorder %s18, 1
      %p109 = por %p107, %p108
      %p111 = scmp.ne.s32.totalorder %s94, %s110
      %p112 = scmp.eq.s32.totalorder %s18, 0
      %p113 = por %p111, %p112
      %p114 = scmp.le.s32.totalorder 1, %s12
      %p115 = scmp.lt.s32.totalorder %s12, 3
      %p116 = pnand %p114, %p115
      %p117 = pneg %p116
      // Predicated region
      $region9: #{a_call__.1} parent=5 // pred_check
        _
      $region10: #{a_call__.1} parent=5 // pred_check_branch
        %119 = sbr.rel (%p116) target = $region12
      $region11: #{a_call__.1} parent=5 // pred_region
        %s120 = ssub.s32 %s12, 1
        // Predicated region
        $region13: #{a_call__.1} parent=11 // pred_check
          %p121 = pneg %p59
        $region14: #{a_call__.1} parent=11 // pred_check_branch
          %123 = sbr.rel (%p121) target = $region16
        $region15: #{a_call__.1} parent=11 // pred_region
          _
        $region16: #{a_call__.1} parent=11 // pred_fallthru
          _
        // Predicated region
        $region17: #{a_call__.1} parent=11 // pred_check
          %p124 = pneg %p80
        $region18: #{a_call__.1} parent=11 // pred_check_branch
          %126 = sbr.rel (%p124) target = $region20
        $region19: #{a_call__.1} parent=11 // pred_region
          _
        $region20: #{a_call__.1} parent=11 // pred_fallthru
          _
      $region12: #{a_call__.1} parent=5 // pred_fallthru
        _
      %p127 = scmp.lt.s32.totalorder %s12, 2
      // Predicated region
      $region21: #{a_call__.1} parent=5 // pred_check
        %p128 = pneg %p127
      $region22: #{a_call__.1} parent=5 // pred_check_branch
        %130 = sbr.rel (%p128) target = $region24
      $region23: #{a_call__.1} parent=5 // pred_region
        // Predicated region
        $region25: #{a_call__.1} parent=23 // pred_check
          %p131 = pneg %p32
        $region26: #{a_call__.1} parent=23 // pred_check_branch
          %133 = sbr.rel (%p131) target = $region28
        $region27: #{a_call__.1} parent=23 // pred_region
          %s134 = smul.u32 2, %s12
          %p135 = scmp.lt.s32.totalorder %s134, 3
          %s136 = scalar_select %p135, %s134, 3
          %s137 = smul.addr %s136, 8
          %s138 = scalar_lea.vmem %s0, %s137
          %s139 = smul.u32 2, %s12
        $region28: #{a_call__.1} parent=23 // pred_fallthru
          _
      $region24: #{a_call__.1} parent=5 // pred_fallthru
        _
      %p140 = scmp.le.s32.totalorder 1, %s12
      %p141 = scmp.lt.s32.totalorder %s12, 3
      %p142 = pnand %p140, %p141
      %p143 = pneg %p142
      // Predicated region
      $region29: #{a_call__.1} parent=5 // pred_check
        _
      $region30: #{a_call__.1} parent=5 // pred_check_branch
        %145 = sbr.rel (%p142) target = $region32
      $region31: #{a_call__.1} parent=5 // pred_region
        %s146 = ssub.s32 %s12, 1
        %s147 = smul.u32 2, %s17
        %p148 = scmp.lt.s32.totalorder %s147, 3
        %s149 = scalar_select %p148, %s147, 3
        %s150 = smul.addr %s149, 8
        %s151 = scalar_lea.vmem %s0, %s150
        %p152 = pneg %p38
        %p153 = pneg %p35
        %p154 = pneg %p59
        %p155 = pneg %p56
        %p156 = pneg %p80
        %p157 = pneg %p77
        %p158 = pneg %p106
        %p159 = pneg %p103
        %s160 = sand.u32 %s93, 1
        %s161 = scalar_lea.sflag [#allocation3], %s160
        %s162 = sand.u32 %s93, 1
        %s163 = smul.addr %s162, 16
        %s164 = scalar_lea.vmem [#allocation2], %s163
        %s165 = smul.u32 2, %s17
        %p166 = scmp.lt.s32.totalorder %s165, 3
        %s167 = scalar_select %p166, %s165, 3
        %s168 = smul.addr %s167, 8
        %s169 = scalar_lea.vmem %s0, %s168
        %s170 = smul.u32 2, %s17
        %s171 = smul.u32 2, %s17
        %v172 = vld [vmem:[%s169] sm:$0xff]
        %v173 = vld [vmem:[%s169 + $0x8] sm:$0xff]
        %v174 = vld [vmem:[%s1] sm:$0xff]
        %v175 = vld [vmem:[%s1 + $0x8] sm:$0xff]
        %v176 = vld [vmem:[%s1 + $0x10] sm:$0xff]
        %v177 = vld [vmem:[%s1 + $0x18] sm:$0xff]
        %v178 = vld [vmem:[%s1 + $0x20] sm:$0xff]
        %v179 = vld [vmem:[%s1 + $0x28] sm:$0xff]
        %v180 = vld [vmem:[%s1 + $0x30] sm:$0xff]
        %v181 = vld [vmem:[%s1 + $0x38] sm:$0xff]
        %v182 = vld [vmem:[%s2] sm:$0x1]
        %v184 = vlaneseq
        %v185 = vshrl.u32 %v184, 7
        %v186 = vsub.s32 0, %v185
        %v187 = vrot.slane %v182, %v186
        %vm189 = vcmask 523264
        %v191 = vsel %vm189, %v172, 0
        %v194 = vsel %vm189, %v173, 0
        %196 = vmatprep.subr.mxu0 0.0
        %197 = vmatpush1.msra.mxu0 0.0
        %198 = vmatprep.subr.mxu0 0.0
        %199 = vmatpush1.msra.mxu0 0.0
        %200 = vmatprep.subr.mxu0 0.0
        %201 = vmatpush1.msra.mxu0 0.0
        %202 = vmatprep.subr.mxu0 0.0
        %203 = vmatpush1.msra.mxu0 0.0
        %204 = vmatprep.subr.mxu0 0.0
        %205 = vmatpush1.msra.mxu0 0.0
        %206 = vmatprep.subr.mxu0 0.0
        %207 = vmatpush1.msra.mxu0 0.0
        %208 = vmatprep.subr.mxu0 0.0
        %209 = vmatpush1.msra.mxu0 0.0
        %210 = vmatprep.subr.mxu0 0.0
        %211 = vmatpush1.msra.mxu0 0.0
        %212 = vmatprep.subr.mxu0 0.0
        %213 = vmatpush1.msra.mxu0 %v181
        %214 = vmatprep.subr.mxu0 0.0
        %215 = vmatpush1.msra.mxu0 %v180
        %216 = vmatprep.subr.mxu0 0.0
        %217 = vmatpush1.msra.mxu0 %v179
        %218 = vmatprep.subr.mxu0 0.0
        %219 = vmatpush1.msra.mxu0 %v178
        %220 = vmatprep.subr.mxu0 0.0
        %221 = vmatpush1.msra.mxu0 %v177
        %222 = vmatprep.subr.mxu0 0.0
        %223 = vmatpush1.msra.mxu0 %v176
        %224 = vmatprep.subr.mxu0 0.0
        %225 = vmatpush1.msra.mxu0 %v175
        %226 = vmatprep.subr.mxu0 0.0
        %227 = vmatpush1.msra.mxu0 %v174
        %228 = vmatprep.subr.mxu0 0.0
        %229 = vmatpush2.msra.mxu0 0.0
        %230 = vmatprep.subr.mxu0 0.0
        %231 = vmatpush2.msra.mxu0 0.0
        %232 = vmatprep.subr.mxu0 0.0
        %233 = vmatpush2.msra.mxu0 0.0
        %234 = vmatprep.subr.mxu0 0.0
        %235 = vmatpush2.msra.mxu0 0.0
        %236 = vmatprep.subr.mxu0 0.0
        %237 = vmatpush2.msra.mxu0 0.0
        %238 = vmatprep.subr.mxu0 0.0
        %239 = vmatpush2.msra.mxu0 0.0
        %240 = vmatprep.subr.mxu0 0.0
        %241 = vmatpush2.msra.mxu0 0.0
        %242 = vmatprep.subr.mxu0 0.0
        %243 = vmatpush2.msra.mxu0 0.0
        %244 = vmatprep.subr.mxu0 0.0
        %245 = vmatpush2.msra.mxu0 0.0
        %246 = vmatprep.subr.mxu0 0.0
        %247 = vmatpush2.msra.mxu0 0.0
        %248 = vmatprep.subr.mxu0 0.0
        %249 = vmatpush2.msra.mxu0 0.0
        %250 = vmatprep.subr.mxu0 0.0
        %251 = vmatpush2.msra.mxu0 0.0
        %252 = vmatprep.subr.mxu0 0.0
        %253 = vmatpush2.msra.mxu0 0.0
        %254 = vmatprep.subr.mxu0 0.0
        %255 = vmatpush2.msra.mxu0 0.0
        %256 = vmatprep.subr.mxu0 0.0
        %257 = vmatpush2.msra.mxu0 0.0
        %258 = vmatprep.subr.mxu0 0.0
        %259 = vmatpush2.msra.mxu0 0.0
        %260 = vmatprep.mubr.f32.mxu0 0.0
        %261 = vmatmul.mubr.f32.gmra.mxu0 %v191
        %v262 = vpop.f32.mrf.mxu0
        %v263 = vadd.f32 %v187, %v262
        %v264 = vpop.f32.mrf.mxu0
        %265 = vmatprep.mubr.f32.mxu0 0.0
        %266 = vmatmul.mubr.f32.gmra.mxu0 %v194
        %v267 = vpop.f32.mrf.mxu0
        %v268 = vadd.f32 %v187, %v267
        %v269 = vpop.f32.mrf.mxu0
        %270 = vdwg.mxu0
        %271 = vst [vmem:[%s164] sm:$0xff] %v263
        %272 = vst [vmem:[%s164 + $0x8] sm:$0xff] %v268
        %s273 = sand.u32 %s93, 1
        %s274 = scalar_lea.sflag [#allocation3], %s273
        %s275 = sand.u32 %s93, 1
        %s276 = smul.addr %s275, 16
        %s277 = scalar_lea.vmem [#allocation2], %s276
        // Predicated region
        $region33: #{a_call__.1} parent=31 // pred_check
          %p278 = pneg %p103
        $region34: #{a_call__.1} parent=31 // pred_check_branch
          %280 = sbr.rel (%p278) target = $region36
        $region35: #{a_call__.1} parent=31 // pred_region
          %s281 = smul.u32 2, %s17
          %s283 = ssub.s32 256, 256
          %284 = vsyncadd %s274, %s283
          %s285 = smul.addr %s281, 128
          %s286 = scalar_lea.hbm %s3, %s285
          %s287 = sshll.u32 %s277, 4
          %s288 = int_to_ptr.vmem [resolvable:$true] %s287
          %293 = dma.vmem_to_hbm [thread:$0]  %s288, 256, %s286, %s274, 128, 128, 8
        $region36: #{a_call__.1} parent=31 // pred_fallthru
          _
      $region32: #{a_call__.1} parent=5 // pred_fallthru
        _
      %p294 = scmp.le.s32.totalorder 2, %s12
      // Predicated region
      $region37: #{a_call__.1} parent=5 // pred_check
        %p295 = pneg %p294
      $region38: #{a_call__.1} parent=5 // pred_check_branch
        %297 = sbr.rel (%p295) target = $region40
      $region39: #{a_call__.1} parent=5 // pred_region
        %s298 = ssub.s32 %s12, 2
        // Predicated region
        $region41: #{a_call__.1} parent=39 // pred_check
          %p299 = pneg %p109
        $region42: #{a_call__.1} parent=39 // pred_check_branch
          %301 = sbr.rel (%p299) target = $region44
        $region43: #{a_call__.1} parent=39 // pred_region
          %s302 = sand.u32 %s94, 1
          %s303 = scalar_lea.sflag [#allocation3], %s302
          %s304 = sand.u32 %s94, 1
          %s305 = smul.addr %s304, 16
          %s306 = scalar_lea.vmem [#allocation2], %s305
          %307 = dma.done %s303, 256
        $region44: #{a_call__.1} parent=39 // pred_fallthru
          _
      $region40: #{a_call__.1} parent=5 // pred_fallthru
        _
    $region6: #{a_call__.1} parent=1 // loop_footer
      %s16 = sadd.s32 1, %s12
    $region7: #{a_call__.1} parent=1 // loop_footer_branch
      %11 = sbr.rel target = $region3
    $region8: #{a_call__.1} parent=1 // loop_exit
      _
    %308 = vsyncpa [#allocation3], 1
    %s309 = scalar_lea.sflag [#allocation3], 1
    %310 = vsyncpa %s309, 1

</llo_original>
